<compile_context>
chip_gen: v7x
topology: tpu7x:2x2x1
jax: 0.10.0
libtpu: 0.0.40
codegen_flags: <defaults>
</compile_context>

<pallas_src>
import functools

import jax
import jax.numpy as jnp
from jax.experimental import pallas as pl
from jax.experimental.pallas import tpu as pltpu


def _vae_fused_kernel(x_ref,
                      wmv1_ref, bmv1_ref, wd1_ref, bd1_ref, eps1_ref,
                      wmv2_ref, bmv2_ref, wd2_ref, bd2_ref, eps2_ref,
                      h1_ref, xhat1_ref, h2_ref, xhat2_ref, kld_ref):
    """Fused VAEModel forward (two VAE1Layer blocks).

    Per layer:
      [mean | log_var] = x @ Wmv + bmv          (single wide GEMM)
      std     = exp(log_var / 2)
      hidden  = mean + std * eps
      x_hat   = tanh(hidden @ Wd + bd)
      kld     = -0.5 * sum(1 + log_var - mean^2 - std*std) / (input_dim * B)
    """
    x = x_ref[...]
    batch = x.shape[0]
    in_dim = x.shape[1]
    h_dim = eps1_ref.shape[1]
    o_dim = eps2_ref.shape[1]

    # ----- layer 1 -----
    enc1 = jnp.dot(x, wmv1_ref[...],
                   preferred_element_type=jnp.float32) + bmv1_ref[...]
    mean1 = enc1[:, :h_dim]
    log_var1 = enc1[:, h_dim:]
    std1 = jnp.exp(log_var1 * 0.5)
    hidden1 = mean1 + std1 * eps1_ref[...]
    h1_ref[...] = hidden1

    kld1 = -0.5 * jnp.sum(1.0 + log_var1 - mean1 * mean1 - std1 * std1)
    kld_ref[0, 0] = kld1 / jnp.float32(in_dim * batch)

    dec1 = jnp.dot(hidden1, wd1_ref[...],
                   preferred_element_type=jnp.float32) + bd1_ref[...]
    xhat1_ref[...] = jnp.tanh(dec1)

    # ----- layer 2 (consumes in-register hidden1, no HBM round trip) -----
    enc2 = jnp.dot(hidden1, wmv2_ref[...],
                   preferred_element_type=jnp.float32) + bmv2_ref[...]
    mean2 = enc2[:, :o_dim]
    log_var2 = enc2[:, o_dim:]
    std2 = jnp.exp(log_var2 * 0.5)
    hidden2 = mean2 + std2 * eps2_ref[...]
    h2_ref[...] = hidden2

    kld2 = -0.5 * jnp.sum(1.0 + log_var2 - mean2 * mean2 - std2 * std2)
    kld_ref[0, 1] = kld2 / jnp.float32(h_dim * batch)

    dec2 = jnp.dot(hidden2, wd2_ref[...],
                   preferred_element_type=jnp.float32) + bd2_ref[...]
    xhat2_ref[...] = jnp.tanh(dec2)


@jax.jit
def vae_model_forward(x, params1, params2, eps1, eps2):
    """Run the full 2-layer VAE forward as a single-block Pallas kernel."""
    batch, input_dim = x.shape
    hidden_dim = eps1.shape[1]
    output_dim = eps2.shape[1]

    vmem = pl.BlockSpec(memory_space=pltpu.MemorySpace.VMEM)
    smem = pl.BlockSpec(memory_space=pltpu.MemorySpace.SMEM)

    h1, xhat1, h2, xhat2, kld = pl.pallas_call(
        _vae_fused_kernel,
        out_shape=(
            jax.ShapeDtypeStruct((batch, hidden_dim), jnp.float32),  # hidden1
            jax.ShapeDtypeStruct((batch, input_dim), jnp.float32),   # input_hat_1
            jax.ShapeDtypeStruct((batch, output_dim), jnp.float32),  # hidden2
            jax.ShapeDtypeStruct((batch, hidden_dim), jnp.float32),  # input_hat_2
            jax.ShapeDtypeStruct((1, 2), jnp.float32),               # kld_1, kld_2
        ),
        in_specs=[vmem] * 11,
        out_specs=(vmem, vmem, vmem, vmem, smem),
    )(x,
      params1["wmv"], params1["bmv"], params1["wd"], params1["bd"], eps1,
      params2["wmv"], params2["bmv"], params2["wd"], params2["bd"], eps2)

    return h1, xhat1, kld[0, 0], h2, xhat2, kld[0, 1]


def init_linear(key, in_dim, out_dim):
    """Mirror weights_init: weight ~ N(0, 0.002), bias = 0.
    Returned weight is [in_dim, out_dim] (transposed vs. PyTorch [out, in])."""
    w = 0.002 * jax.random.normal(key, (in_dim, out_dim), dtype=jnp.float32)
    b = jnp.zeros((1, out_dim), dtype=jnp.float32)
    return w, b


def init_vae1layer(key, input_dim, output_dim):
    k1, k2, k3 = jax.random.split(key, 3)
    wm, bm = init_linear(k1, input_dim, output_dim)   # encoder_mean
    wv, bv = init_linear(k2, input_dim, output_dim)   # encoder_log_var
    wd, bd = init_linear(k3, output_dim, input_dim)   # decoder
    # Fuse mean/log_var encoders into one wide GEMM operand.
    wmv = jnp.concatenate([wm, wv], axis=1)           # [in, 2*out]
    bmv = jnp.concatenate([bm, bv], axis=1)           # [1, 2*out]
    return dict(wmv=wmv, bmv=bmv, wd=wd, bd=bd,
                # keep un-fused copies for the pure-JAX reference check
                wm=wm, bm=bm, wv=wv, bv=bv)


def _layer_ref(x, p, eps):
    mean = x @ p["wm"] + p["bm"]
    log_var = x @ p["wv"] + p["bv"]
    hidden = mean + jnp.exp(log_var / 2) * eps
    x_hat = jnp.tanh(hidden @ p["wd"] + p["bd"])
    kld = -0.5 * jnp.sum(1 + log_var - mean ** 2 - jnp.exp(log_var)) / (
        x.shape[1] * x.shape[0])
    return hidden, x_hat, kld


if __name__ == "__main__":
    batch, input_dim, hidden_dim, output_dim = 8, 16, 32, 8

    key = jax.random.PRNGKey(0)
    kx, kp1, kp2, ke1, ke2 = jax.random.split(key, 5)

    x = jax.random.normal(kx, (batch, input_dim), dtype=jnp.float32)
    params1 = init_vae1layer(kp1, input_dim, hidden_dim)
    params2 = init_vae1layer(kp2, hidden_dim, output_dim)
    # torch.randn_like noise for reparameterization, generated deterministically.
    eps1 = jax.random.normal(ke1, (batch, hidden_dim), dtype=jnp.float32)
    eps2 = jax.random.normal(ke2, (batch, output_dim), dtype=jnp.float32)

    outs = vae_model_forward(x, params1, params2, eps1, eps2)
    outs = jax.block_until_ready(outs)
    hidden1, input_hat_1, kld_1, hidden2, input_hat_2, kld_2 = outs

    # Sanity check against a pure-JAX reference of the same math.
    h1_ref, ih1_ref, k1_ref = _layer_ref(x, params1, eps1)
    h2_ref, ih2_ref, k2_ref = _layer_ref(h1_ref, params2, eps2)
    assert jnp.allclose(hidden1, h1_ref, atol=1e-5)
    assert jnp.allclose(input_hat_1, ih1_ref, atol=1e-5)
    assert jnp.allclose(kld_1, k1_ref, atol=1e-5)
    assert jnp.allclose(hidden2, h2_ref, atol=1e-5)
    assert jnp.allclose(input_hat_2, ih2_ref, atol=1e-5)
    assert jnp.allclose(kld_2, k2_ref, atol=1e-5)

    print("KERNEL_OK")
</pallas_src>

<mosaic_0001>
module attributes {stable_mosaic.version = 11 : i64} {
  func.func @_vae_fused_kernel(%arg0: memref<8x16xf32, #tpu.memory_space<vmem>>, %arg1: memref<16x64xf32, #tpu.memory_space<vmem>>, %arg2: memref<1x64xf32, #tpu.memory_space<vmem>>, %arg3: memref<32x16xf32, #tpu.memory_space<vmem>>, %arg4: memref<1x16xf32, #tpu.memory_space<vmem>>, %arg5: memref<8x32xf32, #tpu.memory_space<vmem>>, %arg6: memref<32x16xf32, #tpu.memory_space<vmem>>, %arg7: memref<1x16xf32, #tpu.memory_space<vmem>>, %arg8: memref<8x32xf32, #tpu.memory_space<vmem>>, %arg9: memref<1x32xf32, #tpu.memory_space<vmem>>, %arg10: memref<8x8xf32, #tpu.memory_space<vmem>>, %arg11: memref<8x32xf32, #tpu.memory_space<vmem>>, %arg12: memref<8x16xf32, #tpu.memory_space<vmem>>, %arg13: memref<8x8xf32, #tpu.memory_space<vmem>>, %arg14: memref<8x32xf32, #tpu.memory_space<vmem>>, %arg15: memref<1x2xf32, #tpu.memory_space<smem>>) attributes {dimension_semantics = [], scalar_prefetch = 0 : i64, scratch_operands = 0 : i64, tpu.core_type = #tpu.core_type<tc>} {
    %c0 = arith.constant 0 : index
    %c0_0 = arith.constant 0 : index
    %0 = vector.load %arg0[%c0, %c0_0] : memref<8x16xf32, #tpu.memory_space<vmem>>, vector<8x16xf32>
    %c0_1 = arith.constant 0 : index
    %c0_2 = arith.constant 0 : index
    %1 = vector.load %arg1[%c0_1, %c0_2] : memref<16x64xf32, #tpu.memory_space<vmem>>, vector<16x64xf32>
    %cst = arith.constant dense<0.000000e+00> : vector<8x64xf32>
    %2 = tpu.matmul %0, %1, %cst {dimension_numbers = #tpu.dot_dimension_numbers<[1], [0], [0], [1], [0, 0, 1, 1], [], []>} : vector<8x16xf32>, vector<16x64xf32>, vector<8x64xf32> -> vector<8x64xf32>
    %c0_3 = arith.constant 0 : index
    %c0_4 = arith.constant 0 : index
    %3 = vector.load %arg2[%c0_3, %c0_4] : memref<1x64xf32, #tpu.memory_space<vmem>>, vector<1x64xf32>
    %4 = vector.broadcast %3 : vector<1x64xf32> to vector<8x64xf32>
    %5 = arith.addf %2, %4 : vector<8x64xf32>
    %6 = vector.extract_strided_slice %5 {offsets = [0, 0], sizes = [8, 32], strides = [1, 1]} : vector<8x64xf32> to vector<8x32xf32>
    %7 = vector.extract_strided_slice %5 {offsets = [0, 32], sizes = [8, 32], strides = [1, 1]} : vector<8x64xf32> to vector<8x32xf32>
    %cst_5 = arith.constant 5.000000e-01 : f32
    %8 = vector.broadcast %cst_5 : f32 to vector<8x32xf32>
    %9 = arith.mulf %7, %8 : vector<8x32xf32>
    %10 = math.exp %9 : vector<8x32xf32>
    %c0_6 = arith.constant 0 : index
    %c0_7 = arith.constant 0 : index
    %11 = vector.load %arg5[%c0_6, %c0_7] : memref<8x32xf32, #tpu.memory_space<vmem>>, vector<8x32xf32>
    %12 = arith.mulf %10, %11 : vector<8x32xf32>
    %13 = arith.addf %6, %12 : vector<8x32xf32>
    %c0_8 = arith.constant 0 : index
    %c0_9 = arith.constant 0 : index
    %14 = vector.load %arg11[%c0_8, %c0_9] : memref<8x32xf32, #tpu.memory_space<vmem>>, vector<8x32xf32>
    tpu.vector_store %arg11[%c0_8, %c0_9], %13 {strides = array<i32>} : memref<8x32xf32, #tpu.memory_space<vmem>>, vector<8x32xf32>,
    %cst_10 = arith.constant 1.000000e+00 : f32
    %15 = vector.broadcast %cst_10 : f32 to vector<8x32xf32>
    %16 = arith.addf %15, %7 : vector<8x32xf32>
    %17 = arith.mulf %6, %6 : vector<8x32xf32>
    %18 = arith.subf %16, %17 : vector<8x32xf32>
    %19 = arith.mulf %10, %10 : vector<8x32xf32>
    %20 = arith.subf %18, %19 : vector<8x32xf32>
    %21 = vector.shape_cast %20 : vector<8x32xf32> to vector<1x8x32xf32>
    %cst_11 = arith.constant dense<0.000000e+00> : vector<1xf32>
    %22 = vector.multi_reduction <add>, %21, %cst_11 [1, 2] : vector<1x8x32xf32> to vector<1xf32>
    %23 = vector.shape_cast %22 : vector<1xf32> to vector<1x1x1xf32>
    %24 = vector.extract %23[0, 0, 0] : f32 from vector<1x1x1xf32>
    %cst_12 = arith.constant -5.000000e-01 : f32
    %25 = arith.mulf %cst_12, %24 : f32
    %cst_13 = arith.constant 1.280000e+02 : f32
    %26 = arith.divf %25, %cst_13 : f32
    %c0_14 = arith.constant 0 : index
    %c0_15 = arith.constant 0 : index
    %27 = memref.load %arg15[%c0_14, %c0_15] : memref<1x2xf32, #tpu.memory_space<smem>>
    memref.store %26, %arg15[%c0_14, %c0_15] : memref<1x2xf32, #tpu.memory_space<smem>>
    %c0_16 = arith.constant 0 : index
    %c0_17 = arith.constant 0 : index
    %28 = vector.load %arg3[%c0_16, %c0_17] : memref<32x16xf32, #tpu.memory_space<vmem>>, vector<32x16xf32>
    %cst_18 = arith.constant dense<0.000000e+00> : vector<8x16xf32>
    %29 = tpu.matmul %13, %28, %cst_18 {dimension_numbers = #tpu.dot_dimension_numbers<[1], [0], [0], [1], [0, 0, 1, 1], [], []>} : vector<8x32xf32>, vector<32x16xf32>, vector<8x16xf32> -> vector<8x16xf32>
    %c0_19 = arith.constant 0 : index
    %c0_20 = arith.constant 0 : index
    %30 = vector.load %arg4[%c0_19, %c0_20] : memref<1x16xf32, #tpu.memory_space<vmem>>, vector<1x16xf32>
    %31 = vector.broadcast %30 : vector<1x16xf32> to vector<8x16xf32>
    %32 = arith.addf %29, %31 : vector<8x16xf32>
    %33 = math.tanh %32 : vector<8x16xf32>
    %c0_21 = arith.constant 0 : index
    %c0_22 = arith.constant 0 : index
    %34 = vector.load %arg12[%c0_21, %c0_22] : memref<8x16xf32, #tpu.memory_space<vmem>>, vector<8x16xf32>
    tpu.vector_store %arg12[%c0_21, %c0_22], %33 {strides = array<i32>} : memref<8x16xf32, #tpu.memory_space<vmem>>, vector<8x16xf32>,
    %c0_23 = arith.constant 0 : index
    %c0_24 = arith.constant 0 : index
    %35 = vector.load %arg6[%c0_23, %c0_24] : memref<32x16xf32, #tpu.memory_space<vmem>>, vector<32x16xf32>
    %cst_25 = arith.constant dense<0.000000e+00> : vector<8x16xf32>
    %36 = tpu.matmul %13, %35, %cst_25 {dimension_numbers = #tpu.dot_dimension_numbers<[1], [0], [0], [1], [0, 0, 1, 1], [], []>} : vector<8x32xf32>, vector<32x16xf32>, vector<8x16xf32> -> vector<8x16xf32>
    %c0_26 = arith.constant 0 : index
    %c0_27 = arith.constant 0 : index
    %37 = vector.load %arg7[%c0_26, %c0_27] : memref<1x16xf32, #tpu.memory_space<vmem>>, vector<1x16xf32>
    %38 = vector.broadcast %37 : vector<1x16xf32> to vector<8x16xf32>
    %39 = arith.addf %36, %38 : vector<8x16xf32>
    %40 = vector.extract_strided_slice %39 {offsets = [0, 0], sizes = [8, 8], strides = [1, 1]} : vector<8x16xf32> to vector<8x8xf32>
    %41 = vector.extract_strided_slice %39 {offsets = [0, 8], sizes = [8, 8], strides = [1, 1]} : vector<8x16xf32> to vector<8x8xf32>
    %cst_28 = arith.constant 5.000000e-01 : f32
    %42 = vector.broadcast %cst_28 : f32 to vector<8x8xf32>
    %43 = arith.mulf %41, %42 : vector<8x8xf32>
    %44 = math.exp %43 : vector<8x8xf32>
    %c0_29 = arith.constant 0 : index
    %c0_30 = arith.constant 0 : index
    %45 = vector.load %arg10[%c0_29, %c0_30] : memref<8x8xf32, #tpu.memory_space<vmem>>, vector<8x8xf32>
    %46 = arith.mulf %44, %45 : vector<8x8xf32>
    %47 = arith.addf %40, %46 : vector<8x8xf32>
    %c0_31 = arith.constant 0 : index
    %c0_32 = arith.constant 0 : index
    %48 = vector.load %arg13[%c0_31, %c0_32] : memref<8x8xf32, #tpu.memory_space<vmem>>, vector<8x8xf32>
    tpu.vector_store %arg13[%c0_31, %c0_32], %47 {strides = array<i32>} : memref<8x8xf32, #tpu.memory_space<vmem>>, vector<8x8xf32>,
    %cst_33 = arith.constant 1.000000e+00 : f32
    %49 = vector.broadcast %cst_33 : f32 to vector<8x8xf32>
    %50 = arith.addf %49, %41 : vector<8x8xf32>
    %51 = arith.mulf %40, %40 : vector<8x8xf32>
    %52 = arith.subf %50, %51 : vector<8x8xf32>
    %53 = arith.mulf %44, %44 : vector<8x8xf32>
    %54 = arith.subf %52, %53 : vector<8x8xf32>
    %55 = vector.shape_cast %54 : vector<8x8xf32> to vector<1x8x8xf32>
    %cst_34 = arith.constant dense<0.000000e+00> : vector<1xf32>
    %56 = vector.multi_reduction <add>, %55, %cst_34 [1, 2] : vector<1x8x8xf32> to vector<1xf32>
    %57 = vector.shape_cast %56 : vector<1xf32> to vector<1x1x1xf32>
    %58 = vector.extract %57[0, 0, 0] : f32 from vector<1x1x1xf32>
    %cst_35 = arith.constant -5.000000e-01 : f32
    %59 = arith.mulf %cst_35, %58 : f32
    %cst_36 = arith.constant 2.560000e+02 : f32
    %60 = arith.divf %59, %cst_36 : f32
    %c0_37 = arith.constant 0 : index
    %c1 = arith.constant 1 : index
    %61 = memref.load %arg15[%c0_37, %c1] : memref<1x2xf32, #tpu.memory_space<smem>>
    memref.store %60, %arg15[%c0_37, %c1] : memref<1x2xf32, #tpu.memory_space<smem>>
    %c0_38 = arith.constant 0 : index
    %c0_39 = arith.constant 0 : index
    %62 = vector.load %arg8[%c0_38, %c0_39] : memref<8x32xf32, #tpu.memory_space<vmem>>, vector<8x32xf32>
    %cst_40 = arith.constant dense<0.000000e+00> : vector<8x32xf32>
    %63 = tpu.matmul %47, %62, %cst_40 {dimension_numbers = #tpu.dot_dimension_numbers<[1], [0], [0], [1], [0, 0, 1, 1], [], []>} : vector<8x8xf32>, vector<8x32xf32>, vector<8x32xf32> -> vector<8x32xf32>
    %c0_41 = arith.constant 0 : index
    %c0_42 = arith.constant 0 : index
    %64 = vector.load %arg9[%c0_41, %c0_42] : memref<1x32xf32, #tpu.memory_space<vmem>>, vector<1x32xf32>
    %65 = vector.broadcast %64 : vector<1x32xf32> to vector<8x32xf32>
    %66 = arith.addf %63, %65 : vector<8x32xf32>
    %67 = math.tanh %66 : vector<8x32xf32>
    %c0_43 = arith.constant 0 : index
    %c0_44 = arith.constant 0 : index
    %68 = vector.load %arg14[%c0_43, %c0_44] : memref<8x32xf32, #tpu.memory_space<vmem>>, vector<8x32xf32>
    tpu.vector_store %arg14[%c0_43, %c0_44], %67 {strides = array<i32>} : memref<8x32xf32, #tpu.memory_space<vmem>>, vector<8x32xf32>,
    return
  }
}

</mosaic_0001>

<llo_original>
// kernel: vae_model_forward.1
$region0: #{vae_model_forward.1}
  #allocation0 [shape = 'u32[]', space=smem, size = 0x4, offset = 0x4, fixed_abs, tag = 'smem constant byte address 0x4 - core index']
  #allocation1 [shape = 'u32[144,128]{1,0:T(1,128)}', space=vmem, size = 0x12000, scoped, tag = 'internal scratch']
  %s0 = inlined_call_operand.vmem [shape: f32[8,16], index: 0, kind: input, shape index: {}]
  %s1 = inlined_call_operand.vmem [shape: f32[16,64], index: 1, kind: input, shape index: {}]
  %s2 = inlined_call_operand.vmem [shape: f32[1,64], index: 2, kind: input, shape index: {}]
  %s3 = inlined_call_operand.vmem [shape: f32[32,16], index: 3, kind: input, shape index: {}]
  %s4 = inlined_call_operand.vmem [shape: f32[1,16], index: 4, kind: input, shape index: {}]
  %s5 = inlined_call_operand.vmem [shape: f32[8,32], index: 5, kind: input, shape index: {}]
  %s6 = inlined_call_operand.vmem [shape: f32[32,16], index: 6, kind: input, shape index: {}]
  %s7 = inlined_call_operand.vmem [shape: f32[1,16], index: 7, kind: input, shape index: {}]
  %s8 = inlined_call_operand.vmem [shape: f32[8,32], index: 8, kind: input, shape index: {}]
  %s9 = inlined_call_operand.vmem [shape: f32[1,32], index: 9, kind: input, shape index: {}]
  %s10 = inlined_call_operand.vmem [shape: f32[8,8], index: 10, kind: input, shape index: {}]
  %s11 = inlined_call_operand.hbm [shape: f32[8,32], index: 11, kind: output, shape index: {0}]
  %s12 = inlined_call_operand.hbm [shape: f32[8,16], index: 12, kind: output, shape index: {1}]
  %s13 = inlined_call_operand.hbm [shape: f32[8,8], index: 13, kind: output, shape index: {2}]
  %s14 = inlined_call_operand.hbm [shape: f32[8,32], index: 14, kind: output, shape index: {3}]
  %s15 = inlined_call_operand.vmem [shape: f32[1,2], index: 15, kind: output, shape index: {4}]
  %16 = xla_tuple %s11, %s12, %s13, %s14, %s15
  %s17 = sld [smem:[#allocation0]]
  $region86: #{vae_model_forward.1} parent=0
    _
  %s19 = ssub.s32 1, %s17
  %s20 = scalar_select 0, %s19, %s17
  $region1: #{vae_model_forward.1} parent=0
    #allocation2 [shape = 'u8[4096]{0}', space=vmem, size = 0x1000, scoped, tag = 'output window, operand 0, single buffered']
    #allocation3 [shape = 's32[1]{0}', space=sflag, size = 0x4, scoped, tag = 'scoped memory for vae_model_forward.1']
    #allocation4 [shape = 's32[1]{0}', space=sflag, size = 0x4, scoped, tag = 'scoped memory for vae_model_forward.1']
    #allocation5 [shape = 'u8[4096]{0}', space=vmem, size = 0x1000, scoped, tag = 'output window, operand 1, single buffered']
    #allocation6 [shape = 's32[1]{0}', space=sflag, size = 0x4, scoped, tag = 'scoped memory for vae_model_forward.1']
    #allocation7 [shape = 'u8[4096]{0}', space=vmem, size = 0x1000, scoped, tag = 'output window, operand 2, single buffered']
    #allocation8 [shape = 'u8[4096]{0}', space=vmem, size = 0x1000, scoped, tag = 'output window, operand 3, single buffered']
    #allocation9 [shape = 's32[1]{0}', space=sflag, size = 0x4, scoped, tag = 'scoped memory for vae_model_forward.1']
    #allocation10 [shape = 'u8[512]{0}', space=smem, size = 0x200, scoped, tag = 'output window, operand 4, single buffered']
    %21 = vsyncpa [#allocation3], 0
    %22 = vsyncpa [#allocation6], 0
    %23 = vsyncpa [#allocation9], 0
    %24 = vsyncpa [#allocation4], 0
    // Predicated region
    $region2: #{vae_model_forward.1} parent=1 // pred_check
      _
    $region3: #{vae_model_forward.1} parent=1 // pred_check_branch
      %26 = sbr.rel (0) target = $region5
    $region4: #{vae_model_forward.1} parent=1 // pred_region
      _
    $region5: #{vae_model_forward.1} parent=1 // pred_fallthru
      _
    // Predicated region
    $region6: #{vae_model_forward.1} parent=1 // pred_check
      _
    $region7: #{vae_model_forward.1} parent=1 // pred_check_branch
      %28 = sbr.rel (0) target = $region9
    $region8: #{vae_model_forward.1} parent=1 // pred_region
      _
    $region9: #{vae_model_forward.1} parent=1 // pred_fallthru
      _
    // Predicated region
    $region10: #{vae_model_forward.1} parent=1 // pred_check
      _
    $region11: #{vae_model_forward.1} parent=1 // pred_check_branch
      %30 = sbr.rel (0) target = $region13
    $region12: #{vae_model_forward.1} parent=1 // pred_region
      _
    $region13: #{vae_model_forward.1} parent=1 // pred_fallthru
      _
    // Predicated region
    $region14: #{vae_model_forward.1} parent=1 // pred_check
      _
    $region15: #{vae_model_forward.1} parent=1 // pred_check_branch
      %32 = sbr.rel (0) target = $region17
    $region16: #{vae_model_forward.1} parent=1 // pred_region
      _
    $region17: #{vae_model_forward.1} parent=1 // pred_fallthru
      _
    // Predicated region
    $region18: #{vae_model_forward.1} parent=1 // pred_check
      _
    $region19: #{vae_model_forward.1} parent=1 // pred_check_branch
      %34 = sbr.rel (0) target = $region21
    $region20: #{vae_model_forward.1} parent=1 // pred_region
      _
    $region21: #{vae_model_forward.1} parent=1 // pred_fallthru
      _
    // Predicated region
    $region22: #{vae_model_forward.1} parent=1 // pred_check
      _
    $region23: #{vae_model_forward.1} parent=1 // pred_check_branch
      %36 = sbr.rel (0) target = $region25
    $region24: #{vae_model_forward.1} parent=1 // pred_region
      _
    $region25: #{vae_model_forward.1} parent=1 // pred_fallthru
      _
    // Predicated region
    $region26: #{vae_model_forward.1} parent=1 // pred_check
      _
    $region27: #{vae_model_forward.1} parent=1 // pred_check_branch
      %38 = sbr.rel (0) target = $region29
    $region28: #{vae_model_forward.1} parent=1 // pred_region
      _
    $region29: #{vae_model_forward.1} parent=1 // pred_fallthru
      _
    // Predicated region
    $region30: #{vae_model_forward.1} parent=1 // pred_check
      _
    $region31: #{vae_model_forward.1} parent=1 // pred_check_branch
      %40 = sbr.rel (0) target = $region33
    $region32: #{vae_model_forward.1} parent=1 // pred_region
      _
    $region33: #{vae_model_forward.1} parent=1 // pred_fallthru
      _
    // Predicated region
    $region34: #{vae_model_forward.1} parent=1 // pred_check
      _
    $region35: #{vae_model_forward.1} parent=1 // pred_check_branch
      %42 = sbr.rel (0) target = $region37
    $region36: #{vae_model_forward.1} parent=1 // pred_region
      _
    $region37: #{vae_model_forward.1} parent=1 // pred_fallthru
      _
    // Predicated region
    $region38: #{vae_model_forward.1} parent=1 // pred_check
      _
    $region39: #{vae_model_forward.1} parent=1 // pred_check_branch
      %44 = sbr.rel (0) target = $region41
    $region40: #{vae_model_forward.1} parent=1 // pred_region
      _
    $region41: #{vae_model_forward.1} parent=1 // pred_fallthru
      _
    // Predicated region
    $region42: #{vae_model_forward.1} parent=1 // pred_check
      _
    $region43: #{vae_model_forward.1} parent=1 // pred_check_branch
      %46 = sbr.rel (0) target = $region45
    $region44: #{vae_model_forward.1} parent=1 // pred_region
      _
    $region45: #{vae_model_forward.1} parent=1 // pred_fallthru
      _
    %v47 = vld [vmem:[%s0] sm:$0xff]
    %v48 = vld [vmem:[%s1] sm:$0xff]
    %v49 = vld [vmem:[%s1 + $0x8] sm:$0xff]
    %v50 = vld [vmem:[%s2] sm:$0x1]
    %v52 = vlaneseq
    %v53 = vshrl.u32 %v52, 7
    %v54 = vsub.s32 0, %v53
    %v55 = vrot.slane %v50, %v54
    %vm57 = vcmask 130048
    %v59 = vsel %vm57, %v47, 0
    %61 = vmatprep.subr.mxu0 0.0
    %62 = vmatpush1.msra.mxu0 %v48
    %63 = vmatprep.subr.mxu0 0.0
    %64 = vmatpush1.msra.mxu0 %v49
    %65 = vmatprep.subr.mxu0 0.0
    %66 = vmatpush1.msra.mxu0 0.0
    %67 = vmatprep.subr.mxu0 0.0
    %68 = vmatpush1.msra.mxu0 0.0
    %69 = vmatprep.subr.mxu0 0.0
    %70 = vmatpush1.msra.mxu0 0.0
    %71 = vmatprep.subr.mxu0 0.0
    %72 = vmatpush1.msra.mxu0 0.0
    %73 = vmatprep.subr.mxu0 0.0
    %74 = vmatpush1.msra.mxu0 0.0
    %75 = vmatprep.subr.mxu0 0.0
    %76 = vmatpush1.msra.mxu0 0.0
    %77 = vmatprep.subr.mxu0 0.0
    %78 = vmatpush1.msra.mxu0 0.0
    %79 = vmatprep.subr.mxu0 0.0
    %80 = vmatpush1.msra.mxu0 0.0
    %81 = vmatprep.subr.mxu0 0.0
    %82 = vmatpush1.msra.mxu0 0.0
    %83 = vmatprep.subr.mxu0 0.0
    %84 = vmatpush1.msra.mxu0 0.0
    %85 = vmatprep.subr.mxu0 0.0
    %86 = vmatpush1.msra.mxu0 0.0
    %87 = vmatprep.subr.mxu0 0.0
    %88 = vmatpush1.msra.mxu0 0.0
    %89 = vmatprep.subr.mxu0 0.0
    %90 = vmatpush1.msra.mxu0 0.0
    %91 = vmatprep.subr.mxu0 0.0
    %92 = vmatpush1.msra.mxu0 0.0
    %93 = vmatprep.subr.mxu0 0.0
    %94 = vmatpush1.msra.mxu0 0.0
    %95 = vmatprep.subr.mxu0 0.0
    %96 = vmatpush1.msra.mxu0 0.0
    %97 = vmatprep.subr.mxu0 0.0
    %98 = vmatpush1.msra.mxu0 0.0
    %99 = vmatprep.subr.mxu0 0.0
    %100 = vmatpush1.msra.mxu0 0.0
    %101 = vmatprep.subr.mxu0 0.0
    %102 = vmatpush1.msra.mxu0 0.0
    %103 = vmatprep.subr.mxu0 0.0
    %104 = vmatpush1.msra.mxu0 0.0
    %105 = vmatprep.subr.mxu0 0.0
    %106 = vmatpush1.msra.mxu0 0.0
    %107 = vmatprep.subr.mxu0 0.0
    %108 = vmatpush1.msra.mxu0 0.0
    %109 = vmatprep.subr.mxu0 0.0
    %110 = vmatpush1.msra.mxu0 0.0
    %111 = vmatprep.subr.mxu0 0.0
    %112 = vmatpush1.msra.mxu0 0.0
    %113 = vmatprep.subr.mxu0 0.0
    %114 = vmatpush1.msra.mxu0 0.0
    %115 = vmatprep.subr.mxu0 0.0
    %116 = vmatpush1.msra.mxu0 0.0
    %117 = vmatprep.subr.mxu0 0.0
    %118 = vmatpush1.msra.mxu0 0.0
    %119 = vmatprep.subr.mxu0 0.0
    %120 = vmatpush1.msra.mxu0 0.0
    %121 = vmatprep.subr.mxu0 0.0
    %122 = vmatpush1.msra.mxu0 0.0
    %123 = vmatprep.subr.mxu0 0.0
    %124 = vmatpush1.msra.mxu0 0.0
    %125 = vmatprep.mubr.f32.mxu0 0.0
    %126 = vmatmul.mubr.f32.gmra.mrb[0].mxu0 %v59
    %v127 = vpop.f32.mrb[0].mxu0
    %v128 = vadd.f32 %v55, %v127
    %v129 = vpop.f32.mrb[0].mxu0
    %130 = vdwg.mxu0
    %v131 = vmul.f32 %v128, 0.5
    %v132 = vmul.f32 %v131, 1.442695
    %v133 = vpow.pop %v132
    %v134 = vld [vmem:[%s5] sm:$0xff]
    %136 = vrot.lane.b32.xlu0 %v134, 32
    %v137 = vpop.permute.xlu0 %136
    %v139 = vmul.f32 %v133, %v137
    %141 = vrot.lane.b32.xlu0 %v139, 96
    %v142 = vpop.permute.xlu0 %141
    %v144 = vadd.f32 %v128, %v142
    %vm145 = vcmask 261120
    %146 = vst.msk [vmem:[#allocation2] sm:$0xff] %vm145, %v144
    %v147 = vadd.f32 %v128, 1.0
    %v148 = vmul.f32 %v128, %v128
    %150 = vrot.lane.b32.xlu0 %v148, 32
    %v151 = vpop.permute.xlu0 %150
    %v153 = vsub.f32 %v147, %v151
    %v154 = vmul.f32 %v133, %v133
    %v155 = vsub.f32 %v153, %v154
    %157 = vrot.lane.b32.xlu0 %v155, 96
    %v158 = vpop.permute.xlu0 %157
    %v160 = vsel %vm145, %v158, 0.0
    %161 = vadd.xlane.f32.xlu0 %v160
    %v162 = vpop.xlane.xlu0 %161
    %v163 = vrot.slane %v162, 4
    %v164 = vadd.f32 %v162, %v163
    %v165 = vrot.slane %v164, 2
    %v166 = vadd.f32 %v164, %v165
    %v167 = vrot.slane %v166, 1
    %v168 = vadd.f32 %v166, %v167
    %s169 = vtos %v168
    %s170 = smul.f32 %s169, -0.5
    %v171 = vrcp.pop 128.0
    %s172 = vtos %v171
    %s173 = smul.f32 %s170, %s172
    %s174 = scalar_lea.smem [#allocation10], 0
    %175 = sst [smem:[%s174]] %s173
    %v176 = vld [vmem:[%s3] sm:$0xff]
    %v177 = vld [vmem:[%s3 + $0x8] sm:$0xff]
    %v178 = vld [vmem:[%s3 + $0x10] sm:$0xff]
    %v179 = vld [vmem:[%s3 + $0x18] sm:$0xff]
    %v180 = vld [vmem:[%s4] sm:$0x1]
    %v182 = vlaneseq
    %v183 = vshrl.u32 %v182, 7
    %v184 = vsub.s32 0, %v183
    %v185 = vrot.slane %v180, %v184
    %v188 = vsel %vm145, %v144, 0
    %190 = vmatprep.subr.mxu0 0.0
    %191 = vmatpush1.msra.mxu0 %v176
    %192 = vmatprep.subr.mxu0 0.0
    %193 = vmatpush1.msra.mxu0 %v177
    %194 = vmatprep.subr.mxu0 0.0
    %195 = vmatpush1.msra.mxu0 %v178
    %196 = vmatprep.subr.mxu0 0.0
    %197 = vmatpush1.msra.mxu0 %v179
    %198 = vmatprep.subr.mxu0 0.0
    %199 = vmatpush1.msra.mxu0 0.0
    %200 = vmatprep.subr.mxu0 0.0
    %201 = vmatpush1.msra.mxu0 0.0
    %202 = vmatprep.subr.mxu0 0.0
    %203 = vmatpush1.msra.mxu0 0.0
    %204 = vmatprep.subr.mxu0 0.0
    %205 = vmatpush1.msra.mxu0 0.0
    %206 = vmatprep.subr.mxu0 0.0
    %207 = vmatpush1.msra.mxu0 0.0
    %208 = vmatprep.subr.mxu0 0.0
    %209 = vmatpush1.msra.mxu0 0.0
    %210 = vmatprep.subr.mxu0 0.0
    %211 = vmatpush1.msra.mxu0 0.0
    %212 = vmatprep.subr.mxu0 0.0
    %213 = vmatpush1.msra.mxu0 0.0
    %214 = vmatprep.subr.mxu0 0.0
    %215 = vmatpush1.msra.mxu0 0.0
    %216 = vmatprep.subr.mxu0 0.0
    %217 = vmatpush1.msra.mxu0 0.0
    %218 = vmatprep.subr.mxu0 0.0
    %219 = vmatpush1.msra.mxu0 0.0
    %220 = vmatprep.subr.mxu0 0.0
    %221 = vmatpush1.msra.mxu0 0.0
    %222 = vmatprep.subr.mxu0 0.0
    %223 = vmatpush1.msra.mxu0 0.0
    %224 = vmatprep.subr.mxu0 0.0
    %225 = vmatpush1.msra.mxu0 0.0
    %226 = vmatprep.subr.mxu0 0.0
    %227 = vmatpush1.msra.mxu0 0.0
    %228 = vmatprep.subr.mxu0 0.0
    %229 = vmatpush1.msra.mxu0 0.0
    %230 = vmatprep.subr.mxu0 0.0
    %231 = vmatpush1.msra.mxu0 0.0
    %232 = vmatprep.subr.mxu0 0.0
    %233 = vmatpush1.msra.mxu0 0.0
    %234 = vmatprep.subr.mxu0 0.0
    %235 = vmatpush1.msra.mxu0 0.0
    %236 = vmatprep.subr.mxu0 0.0
    %237 = vmatpush1.msra.mxu0 0.0
    %238 = vmatprep.subr.mxu0 0.0
    %239 = vmatpush1.msra.mxu0 0.0
    %240 = vmatprep.subr.mxu0 0.0
    %241 = vmatpush1.msra.mxu0 0.0
    %242 = vmatprep.subr.mxu0 0.0
    %243 = vmatpush1.msra.mxu0 0.0
    %244 = vmatprep.subr.mxu0 0.0
    %245 = vmatpush1.msra.mxu0 0.0
    %246 = vmatprep.subr.mxu0 0.0
    %247 = vmatpush1.msra.mxu0 0.0
    %248 = vmatprep.subr.mxu0 0.0
    %249 = vmatpush1.msra.mxu0 0.0
    %250 = vmatprep.subr.mxu0 0.0
    %251 = vmatpush1.msra.mxu0 0.0
    %252 = vmatprep.subr.mxu0 0.0
    %253 = vmatpush1.msra.mxu0 0.0
    %254 = vmatprep.mubr.f32.mxu0 0.0
    %255 = vmatmul.mubr.f32.gmra.mrb[0].mxu0 %v188
    %v256 = vpop.f32.mrb[0].mxu0
    %v257 = vadd.f32 %v185, %v256
    %v258 = vpop.f32.mrb[0].mxu0
    %259 = vdwg.mxu0
    %v260 = vtanh.pop %v257
    %261 = vst.msk [vmem:[#allocation5] sm:$0xff] %vm57, %v260
    %v262 = vld [vmem:[%s6] sm:$0xff]
    %v263 = vld [vmem:[%s6 + $0x8] sm:$0xff]
    %v264 = vld [vmem:[%s6 + $0x10] sm:$0xff]
    %v265 = vld [vmem:[%s6 + $0x18] sm:$0xff]
    %v266 = vld [vmem:[%s7] sm:$0x1]
    %v268 = vlaneseq
    %v269 = vshrl.u32 %v268, 7
    %v270 = vsub.s32 0, %v269
    %v271 = vrot.slane %v266, %v270
    %273 = vmatprep.subr.mxu0 0.0
    %274 = vmatpush1.msra.mxu0 %v262
    %275 = vmatprep.subr.mxu0 0.0
    %276 = vmatpush1.msra.mxu0 %v263
    %277 = vmatprep.subr.mxu0 0.0
    %278 = vmatpush1.msra.mxu0 %v264
    %279 = vmatprep.subr.mxu0 0.0
    %280 = vmatpush1.msra.mxu0 %v265
    %281 = vmatprep.subr.mxu0 0.0
    %282 = vmatpush1.msra.mxu0 0.0
    %283 = vmatprep.subr.mxu0 0.0
    %284 = vmatpush1.msra.mxu0 0.0
    %285 = vmatprep.subr.mxu0 0.0
    %286 = vmatpush1.msra.mxu0 0.0
    %287 = vmatprep.subr.mxu0 0.0
    %288 = vmatpush1.msra.mxu0 0.0
    %289 = vmatprep.subr.mxu0 0.0
    %290 = vmatpush1.msra.mxu0 0.0
    %291 = vmatprep.subr.mxu0 0.0
    %292 = vmatpush1.msra.mxu0 0.0
    %293 = vmatprep.subr.mxu0 0.0
    %294 = vmatpush1.msra.mxu0 0.0
    %295 = vmatprep.subr.mxu0 0.0
    %296 = vmatpush1.msra.mxu0 0.0
    %297 = vmatprep.subr.mxu0 0.0
    %298 = vmatpush1.msra.mxu0 0.0
    %299 = vmatprep.subr.mxu0 0.0
    %300 = vmatpush1.msra.mxu0 0.0
    %301 = vmatprep.subr.mxu0 0.0
    %302 = vmatpush1.msra.mxu0 0.0
    %303 = vmatprep.subr.mxu0 0.0
    %304 = vmatpush1.msra.mxu0 0.0
    %305 = vmatprep.subr.mxu0 0.0
    %306 = vmatpush1.msra.mxu0 0.0
    %307 = vmatprep.subr.mxu0 0.0
    %308 = vmatpush1.msra.mxu0 0.0
    %309 = vmatprep.subr.mxu0 0.0
    %310 = vmatpush1.msra.mxu0 0.0
    %311 = vmatprep.subr.mxu0 0.0
    %312 = vmatpush1.msra.mxu0 0.0
    %313 = vmatprep.subr.mxu0 0.0
    %314 = vmatpush1.msra.mxu0 0.0
    %315 = vmatprep.subr.mxu0 0.0
    %316 = vmatpush1.msra.mxu0 0.0
    %317 = vmatprep.subr.mxu0 0.0
    %318 = vmatpush1.msra.mxu0 0.0
    %319 = vmatprep.subr.mxu0 0.0
    %320 = vmatpush1.msra.mxu0 0.0
    %321 = vmatprep.subr.mxu0 0.0
    %322 = vmatpush1.msra.mxu0 0.0
    %323 = vmatprep.subr.mxu0 0.0
    %324 = vmatpush1.msra.mxu0 0.0
    %325 = vmatprep.subr.mxu0 0.0
    %326 = vmatpush1.msra.mxu0 0.0
    %327 = vmatprep.subr.mxu0 0.0
    %328 = vmatpush1.msra.mxu0 0.0
    %329 = vmatprep.subr.mxu0 0.0
    %330 = vmatpush1.msra.mxu0 0.0
    %331 = vmatprep.subr.mxu0 0.0
    %332 = vmatpush1.msra.mxu0 0.0
    %333 = vmatprep.subr.mxu0 0.0
    %334 = vmatpush1.msra.mxu0 0.0
    %335 = vmatprep.subr.mxu0 0.0
    %336 = vmatpush1.msra.mxu0 0.0
    %337 = vmatprep.mubr.f32.mxu0 0.0
    %338 = vmatmul.mubr.f32.gmra.mrb[0].mxu0 %v188
    %v339 = vpop.f32.mrb[0].mxu0
    %v340 = vadd.f32 %v271, %v339
    %v341 = vpop.f32.mrb[0].mxu0
    %342 = vdwg.mxu0
    %v343 = vmul.f32 %v340, 0.5
    %v344 = vmul.f32 %v343, 1.442695
    %v345 = vpow.pop %v344
    %v346 = vld [vmem:[%s10] sm:$0xff]
    %348 = vrot.lane.b32.xlu0 %v346, 8
    %v349 = vpop.permute.xlu0 %348
    %v351 = vmul.f32 %v345, %v349
    %353 = vrot.lane.b32.xlu0 %v351, 120
    %v354 = vpop.permute.xlu0 %353
    %v356 = vadd.f32 %v340, %v354
    %vm357 = vcmask 64512
    %358 = vst.msk [vmem:[#allocation7] sm:$0xff] %vm357, %v356
    %v359 = vadd.f32 %v340, 1.0
    %v360 = vmul.f32 %v340, %v340
    %362 = vrot.lane.b32.xlu0 %v360, 8
    %v363 = vpop.permute.xlu0 %362
    %v365 = vsub.f32 %v359, %v363
    %v366 = vmul.f32 %v345, %v345
    %v367 = vsub.f32 %v365, %v366
    %369 = vrot.lane.b32.xlu0 %v367, 120
    %v370 = vpop.permute.xlu0 %369
    %v372 = vsel %vm357, %v370, 0.0
    %373 = vadd.xlane.f32.xlu0 %v372
    %v374 = vpop.xlane.xlu0 %373
    %v375 = vrot.slane %v374, 4
    %v376 = vadd.f32 %v374, %v375
    %v377 = vrot.slane %v376, 2
    %v378 = vadd.f32 %v376, %v377
    %v379 = vrot.slane %v378, 1
    %v380 = vadd.f32 %v378, %v379
    %s381 = vtos %v380
    %s382 = smul.f32 %s381, -0.5
    %v383 = vrcp.pop 256.0
    %s384 = vtos %v383
    %s385 = smul.f32 %s382, %s384
    %s386 = scalar_lea.smem [#allocation10], 1
    %387 = sst [smem:[%s386]] %s385
    %v388 = vld [vmem:[%s8] sm:$0xff]
    %v389 = vld [vmem:[%s9] sm:$0x1]
    %v391 = vlaneseq
    %v392 = vshrl.u32 %v391, 7
    %v393 = vsub.s32 0, %v392
    %v394 = vrot.slane %v389, %v393
    %v397 = vsel %vm357, %v356, 0
    %399 = vmatprep.subr.mxu0 0.0
    %400 = vmatpush1.msra.mxu0 %v388
    %401 = vmatprep.subr.mxu0 0.0
    %402 = vmatpush1.msra.mxu0 0.0
    %403 = vmatprep.subr.mxu0 0.0
    %404 = vmatpush1.msra.mxu0 0.0
    %405 = vmatprep.subr.mxu0 0.0
    %406 = vmatpush1.msra.mxu0 0.0
    %407 = vmatprep.subr.mxu0 0.0
    %408 = vmatpush1.msra.mxu0 0.0
    %409 = vmatprep.subr.mxu0 0.0
    %410 = vmatpush1.msra.mxu0 0.0
    %411 = vmatprep.subr.mxu0 0.0
    %412 = vmatpush1.msra.mxu0 0.0
    %413 = vmatprep.subr.mxu0 0.0
    %414 = vmatpush1.msra.mxu0 0.0
    %415 = vmatprep.subr.mxu0 0.0
    %416 = vmatpush1.msra.mxu0 0.0
    %417 = vmatprep.subr.mxu0 0.0
    %418 = vmatpush1.msra.mxu0 0.0
    %419 = vmatprep.subr.mxu0 0.0
    %420 = vmatpush1.msra.mxu0 0.0
    %421 = vmatprep.subr.mxu0 0.0
    %422 = vmatpush1.msra.mxu0 0.0
    %423 = vmatprep.subr.mxu0 0.0
    %424 = vmatpush1.msra.mxu0 0.0
    %425 = vmatprep.subr.mxu0 0.0
    %426 = vmatpush1.msra.mxu0 0.0
    %427 = vmatprep.subr.mxu0 0.0
    %428 = vmatpush1.msra.mxu0 0.0
    %429 = vmatprep.subr.mxu0 0.0
    %430 = vmatpush1.msra.mxu0 0.0
    %431 = vmatprep.subr.mxu0 0.0
    %432 = vmatpush1.msra.mxu0 0.0
    %433 = vmatprep.subr.mxu0 0.0
    %434 = vmatpush1.msra.mxu0 0.0
    %435 = vmatprep.subr.mxu0 0.0
    %436 = vmatpush1.msra.mxu0 0.0
    %437 = vmatprep.subr.mxu0 0.0
    %438 = vmatpush1.msra.mxu0 0.0
    %439 = vmatprep.subr.mxu0 0.0
    %440 = vmatpush1.msra.mxu0 0.0
    %441 = vmatprep.subr.mxu0 0.0
    %442 = vmatpush1.msra.mxu0 0.0
    %443 = vmatprep.subr.mxu0 0.0
    %444 = vmatpush1.msra.mxu0 0.0
    %445 = vmatprep.subr.mxu0 0.0
    %446 = vmatpush1.msra.mxu0 0.0
    %447 = vmatprep.subr.mxu0 0.0
    %448 = vmatpush1.msra.mxu0 0.0
    %449 = vmatprep.subr.mxu0 0.0
    %450 = vmatpush1.msra.mxu0 0.0
    %451 = vmatprep.subr.mxu0 0.0
    %452 = vmatpush1.msra.mxu0 0.0
    %453 = vmatprep.subr.mxu0 0.0
    %454 = vmatpush1.msra.mxu0 0.0
    %455 = vmatprep.subr.mxu0 0.0
    %456 = vmatpush1.msra.mxu0 0.0
    %457 = vmatprep.subr.mxu0 0.0
    %458 = vmatpush1.msra.mxu0 0.0
    %459 = vmatprep.subr.mxu0 0.0
    %460 = vmatpush1.msra.mxu0 0.0
    %461 = vmatprep.subr.mxu0 0.0
    %462 = vmatpush1.msra.mxu0 0.0
    %463 = vmatprep.mubr.f32.mxu0 0.0
    %464 = vmatmul.mubr.f32.gmra.mrb[0].mxu0 %v397
    %v465 = vpop.f32.mrb[0].mxu0
    %v466 = vadd.f32 %v394, %v465
    %v467 = vpop.f32.mrb[0].mxu0
    %468 = vdwg.mxu0
    %v469 = vtanh.pop %v466
    %470 = vst.msk [vmem:[#allocation8] sm:$0xff] %vm145, %v469
    // Predicated region
    $region46: #{vae_model_forward.1} parent=1 // pred_check
      _
    $region47: #{vae_model_forward.1} parent=1 // pred_check_branch
      %472 = sbr.rel (0) target = $region49
    $region48: #{vae_model_forward.1} parent=1 // pred_region
      %s474 = ssub.s32 128, 128
      %475 = vsyncadd [#allocation3], %s474
      %s477 = sshll.u32 [#allocation2], 4
      %s478 = int_to_ptr.vmem [resolvable:$true] %s477
      %480 = dma.vmem_to_hbm [thread:$0]  %s478, 128, %s11, [#allocation3]
    $region49: #{vae_model_forward.1} parent=1 // pred_fallthru
      _
    // Predicated region
    $region50: #{vae_model_forward.1} parent=1 // pred_check
      _
    $region51: #{vae_model_forward.1} parent=1 // pred_check_branch
      %482 = sbr.rel (0) target = $region53
    $region52: #{vae_model_forward.1} parent=1 // pred_region
      %s484 = ssub.s32 128, 128
      %485 = vsyncadd [#allocation6], %s484
      %s487 = sshll.u32 [#allocation5], 4
      %s488 = int_to_ptr.vmem [resolvable:$true] %s487
      %490 = dma.vmem_to_hbm [thread:$0]  %s488, 128, %s12, [#allocation6]
    $region53: #{vae_model_forward.1} parent=1 // pred_fallthru
      _
    // Predicated region
    $region54: #{vae_model_forward.1} parent=1 // pred_check
      _
    $region55: #{vae_model_forward.1} parent=1 // pred_check_branch
      %492 = sbr.rel (0) target = $region57
    $region56: #{vae_model_forward.1} parent=1 // pred_region
      %s494 = ssub.s32 128, 128
      %495 = vsyncadd [#allocation6], %s494
      %s497 = sshll.u32 [#allocation7], 4
      %s498 = int_to_ptr.vmem [resolvable:$true] %s497
      %500 = dma.vmem_to_hbm [thread:$0]  %s498, 128, %s13, [#allocation6]
    $region57: #{vae_model_forward.1} parent=1 // pred_fallthru
      _
    // Predicated region
    $region58: #{vae_model_forward.1} parent=1 // pred_check
      _
    $region59: #{vae_model_forward.1} parent=1 // pred_check_branch
      %502 = sbr.rel (0) target = $region61
    $region60: #{vae_model_forward.1} parent=1 // pred_region
      %s504 = ssub.s32 128, 128
      %505 = vsyncadd [#allocation9], %s504
      %s507 = sshll.u32 [#allocation8], 4
      %s508 = int_to_ptr.vmem [resolvable:$true] %s507
      %510 = dma.vmem_to_hbm [thread:$0]  %s508, 128, %s14, [#allocation9]
    $region61: #{vae_model_forward.1} parent=1 // pred_fallthru
      _
    // Predicated region
    $region62: #{vae_model_forward.1} parent=1 // pred_check
      _
    $region63: #{vae_model_forward.1} parent=1 // pred_check_branch
      %512 = sbr.rel (0) target = $region65
    $region64: #{vae_model_forward.1} parent=1 // pred_region
      %s514 = ssub.s32 16, 16
      %515 = vsyncadd [#allocation4], %s514
      %s517 = sshll.u32 %s15, 4
      %s518 = int_to_ptr.vmem [resolvable:$true] %s517
      %520 = dma.smem_to_vmem [#allocation10], 16, %s518, [#allocation4]
    $region65: #{vae_model_forward.1} parent=1 // pred_fallthru
      _
    // Predicated region
    $region66: #{vae_model_forward.1} parent=1 // pred_check
      _
    $region67: #{vae_model_forward.1} parent=1 // pred_check_branch
      %522 = sbr.rel (0) target = $region69
    $region68: #{vae_model_forward.1} parent=1 // pred_region
      %523 = dma.done [#allocation3], 128
    $region69: #{vae_model_forward.1} parent=1 // pred_fallthru
      _
    // Predicated region
    $region70: #{vae_model_forward.1} parent=1 // pred_check
      _
    $region71: #{vae_model_forward.1} parent=1 // pred_check_branch
      %525 = sbr.rel (0) target = $region73
    $region72: #{vae_model_forward.1} parent=1 // pred_region
      %526 = dma.done [#allocation6], 128
    $region73: #{vae_model_forward.1} parent=1 // pred_fallthru
      _
    // Predicated region
    $region74: #{vae_model_forward.1} parent=1 // pred_check
      _
    $region75: #{vae_model_forward.1} parent=1 // pred_check_branch
      %528 = sbr.rel (0) target = $region77
    $region76: #{vae_model_forward.1} parent=1 // pred_region
      %529 = dma.done [#allocation6], 128
    $region77: #{vae_model_forward.1} parent=1 // pred_fallthru
      _
    // Predicated region
    $region78: #{vae_model_forward.1} parent=1 // pred_check
      _
    $region79: #{vae_model_forward.1} parent=1 // pred_check_branch
      %531 = sbr.rel (0) target = $region81
    $region80: #{vae_model_forward.1} parent=1 // pred_region
      %532 = dma.done [#allocation9], 128
    $region81: #{vae_model_forward.1} parent=1 // pred_fallthru
      _
    // Predicated region
    $region82: #{vae_model_forward.1} parent=1 // pred_check
      _
    $region83: #{vae_model_forward.1} parent=1 // pred_check_branch
      %534 = sbr.rel (0) target = $region85
    $region84: #{vae_model_forward.1} parent=1 // pred_region
      %535 = dma.done [#allocation4], 16
    $region85: #{vae_model_forward.1} parent=1 // pred_fallthru
      _
    %536 = sfence
    %537 = vsyncpa [#allocation3], 1
    %538 = vsyncpa [#allocation6], 1
    %539 = vsyncpa [#allocation9], 1
    %540 = vsyncpa [#allocation4], 1

</llo_original>
